<compile_context>
chip_gen: v5e
topology: v5e:2x2
jax: 0.10.0
libtpu: 0.0.40
codegen_flags: <defaults>
</compile_context>

<pallas_src>
import functools

import jax
import jax.numpy as jnp
from jax.experimental import pallas as pl
from jax.experimental.pallas import tpu as pltpu


def _intensity_kernel(num_hidden_layers,
                      h_ref,      # VMEM [B, H]   hidden_state
                      tt_ref,     # VMEM [B, 1]   target_time
                      rows_ref,   # VMEM [6+L, M] packed row params (pre-clamped)
                      w2h_ref,    # VMEM [H, M]   linear2 weight, hidden part ([in, out])
                      wl_ref,     # VMEM [max(L,1), M, M] hidden-layer weights ([in, out])
                      out_ref):   # VMEM [B, 4]   (nll, log_lmbda, int_lmbda, lmbda)
    B = h_ref.shape[0]

    h = h_ref[...]                      # [B, H]
    tt = tt_ref[...]                    # [B, 1]
    rows = rows_ref[...]                # [6+L, M]

    w2t = rows[0:1, :]                  # [1, M]  linear2 weight column for t
    b2 = rows[1:2, :]                   # [1, M]
    w3r = rows[2:3, :]                  # [1, M]  linear3 weight as a row
    w1 = rows[3:4, 0:1]                 # [1, 1]
    b1 = rows[4:5, 0:1]                 # [1, 1]
    b3 = rows[5:6, 0:1]                 # [1, 1]

    # t = linear1(target_time.unsqueeze(-1))
    t = tt * w1 + b1                    # [B, 1]

    # linear2(cat([hidden_state, t], -1)) == h @ W2h + t * w2t + b2
    z = jnp.dot(h, w2h_ref[...], preferred_element_type=jnp.float32) + t * w2t + b2
    out = jnp.tanh(z)                   # [B, M]
    # forward-mode derivative of `out` w.r.t. target_time
    dout = (1.0 - out * out) * (w1 * w2t)                    # [B, M]

    # Hidden layers: stack [activation; derivative] -> one MXU matmul per layer.
    for l in range(num_hidden_layers):                       # static unroll
        W = wl_ref[l]                                        # [M, M]
        b = rows[6 + l:7 + l, :]                             # [1, M]
        pair = jnp.concatenate([out, dout], axis=0)          # [2B, M]
        zpair = jnp.dot(pair, W, preferred_element_type=jnp.float32)
        out = jnp.tanh(zpair[:B, :] + b)
        dout = (1.0 - out * out) * zpair[B:, :]

    # linear3 ([M] -> 1): VPU multiply + lane reduction (skip the [M,1] MXU op).
    z3 = jnp.sum(out * w3r, axis=-1, keepdims=True) + b3     # [B, 1]
    dz3 = jnp.sum(dout * w3r, axis=-1, keepdims=True)        # [B, 1]

    int_lmbda = jnp.logaddexp(z3, 0.0)                       # softplus
    # d softplus(z3)/dt = sigmoid(z3) * dz3   (exp sits on the EUP slot)
    lmbda = dz3 * (1.0 / (1.0 + jnp.exp(-z3)))
    log_l = jnp.log(lmbda + 1e-10)
    nll = int_lmbda - log_l

    # Single lane-packed store: one writeback DMA instead of four lane-1 stores.
    out_ref[...] = jnp.concatenate([nll, log_l, int_lmbda, lmbda], axis=-1)


def prepare_params(params):
    """One-time parameter packing (cache the result outside the hot path).

    Applies the module's non-negativity clamp (`p.data *= p.data >= 0`),
    transposes every weight to [in, out] layout so every layer is `x @ W`,
    and packs all row/scalar parameters into a single [6+L, M] table.
    """
    p = jax.tree_util.tree_map(
        lambda x: jnp.maximum(x.astype(jnp.float32), 0.0), params)
    M, Hp1 = p["w2"].shape
    H = Hp1 - 1
    L = len(p["wl"])

    def scal_row(x):
        return jnp.zeros((1, M), jnp.float32).at[0, 0].set(x.reshape(()))

    rows = jnp.concatenate(
        [p["w2"][:, H:].T,             # 0: w2t   [1, M]
         p["b2"].reshape(1, M),        # 1: b2
         p["w3"].reshape(1, M),        # 2: w3 as a row
         scal_row(p["w1"]),            # 3: w1 at lane 0
         scal_row(p["b1"]),            # 4: b1 at lane 0
         scal_row(p["b3"])]            # 5: b3 at lane 0
        + [b.reshape(1, M) for b in p["bl"]],  # 6 .. 6+L-1: hidden-layer biases
        axis=0)                                                   # [6+L, M]

    w2h = p["w2"][:, :H].T                                        # [H, M]
    wl = (jnp.stack([W.T for W in p["wl"]])
          if L > 0 else jnp.zeros((1, M, M), jnp.float32))        # [L, M, M]
    return {"rows": rows, "w2h": w2h, "wl": wl}


def intensity_net_forward(hidden_state, target_time, prepared):
    """Pallas IntensityNet.forward.

    Returns [nll, log(lmbda + 1e-10), int_lmbda, lmbda], each of shape [B].
    """
    B, _ = hidden_state.shape
    L = prepared["rows"].shape[0] - 6

    tt = target_time.reshape(B, 1).astype(jnp.float32)

    vmem = pl.BlockSpec(memory_space=pltpu.MemorySpace.VMEM)
    packed = pl.pallas_call(
        functools.partial(_intensity_kernel, L),
        out_shape=jax.ShapeDtypeStruct((B, 4), jnp.float32),
        in_specs=[vmem] * 5,
        out_specs=vmem,
        # TODO(synk): for production batch sizes add a batch grid (tile ~256
        # rows, dimension_semantics=("parallel",)) so the batch is sharded over
        # v7x's 2 TensorCores and input DMAs overlap compute.
    )(hidden_state.astype(jnp.float32), tt,
      prepared["rows"], prepared["w2h"], prepared["wl"])

    nll, log_lmbda, int_lmbda, lmbda = (packed[:, i] for i in range(4))
    return [nll, log_lmbda, int_lmbda, lmbda]


def _reference_forward(hidden_state, target_time, params):
    """Pure-JAX reference using jax.grad (mirrors the PyTorch autograd.grad)."""
    p = jax.tree_util.tree_map(lambda x: jnp.maximum(x, 0.0), params)

    def int_lmbda_fn(tt):
        t = tt[:, None] @ p["w1"].T + p["b1"]
        x = jnp.concatenate([hidden_state, t], axis=-1)
        out = jnp.tanh(x @ p["w2"].T + p["b2"])
        for W, b in zip(p["wl"], p["bl"]):
            out = jnp.tanh(out @ W.T + b)
        z3 = out @ p["w3"].T + p["b3"]
        return jax.nn.softplus(z3)[:, 0]

    il = int_lmbda_fn(target_time)
    lm = jax.grad(lambda tt: jnp.sum(int_lmbda_fn(tt)))(target_time)
    log_l = jnp.log(lm + 1e-10)
    return [il - log_l, log_l, il, lm]


def _init_params(key, hid_dim, mlp_dim, mlp_layer):
    """Deterministic PyTorch-style uniform(-1/sqrt(fan_in), 1/sqrt(fan_in)) init."""
    def lin(k, fan_in, fan_out):
        kw, kb = jax.random.split(k)
        bound = 1.0 / jnp.sqrt(fan_in)
        w = jax.random.uniform(kw, (fan_out, fan_in), jnp.float32, -bound, bound)
        b = jax.random.uniform(kb, (fan_out,), jnp.float32, -bound, bound)
        return w, b

    keys = jax.random.split(key, 3 + (mlp_layer - 1))
    w1, b1 = lin(keys[0], 1, 1)
    w2, b2 = lin(keys[1], hid_dim + 1, mlp_dim)
    wl, bl = [], []
    for i in range(mlp_layer - 1):
        W, b = lin(keys[2 + i], mlp_dim, mlp_dim)
        wl.append(W)
        bl.append(b)
    w3, b3 = lin(keys[-1], mlp_dim, 1)
    return {"w1": w1, "b1": b1, "w2": w2, "b2": b2,
            "wl": wl, "bl": bl, "w3": w3, "b3": b3}


if __name__ == "__main__":
    B, HID_DIM, MLP_DIM, MLP_LAYER = 16, 32, 32, 3

    key = jax.random.PRNGKey(0)
    k_h, k_t, k_p = jax.random.split(key, 3)
    hidden_state = jax.random.normal(k_h, (B, HID_DIM), jnp.float32)
    target_time = jax.random.uniform(k_t, (B,), jnp.float32, 0.1, 2.0)
    params = _init_params(k_p, HID_DIM, MLP_DIM, MLP_LAYER)

    prepared = prepare_params(params)          # one-time, outside the hot path
    outs = intensity_net_forward(hidden_state, target_time, prepared)
    outs = jax.block_until_ready(outs)

    refs = _reference_forward(hidden_state, target_time, params)
    for got, want in zip(outs, refs):
        assert got.shape == want.shape
        assert jnp.allclose(got, want, rtol=1e-4, atol=1e-4), (got, want)

    print("KERNEL_OK")
</pallas_src>

<mosaic_0001>
module attributes {stable_mosaic.version = 11 : i64} {
  func.func @_intensity_kernel(%arg0: memref<16x32xf32, #tpu.memory_space<vmem>>, %arg1: memref<16x1xf32, #tpu.memory_space<vmem>>, %arg2: memref<8x32xf32, #tpu.memory_space<vmem>>, %arg3: memref<32x32xf32, #tpu.memory_space<vmem>>, %arg4: memref<2x32x32xf32, #tpu.memory_space<vmem>>, %arg5: memref<16x4xf32, #tpu.memory_space<vmem>>) attributes {dimension_semantics = [], scalar_prefetch = 0 : i64, scratch_operands = 0 : i64, tpu.core_type = #tpu.core_type<tc>} {
    %c0 = arith.constant 0 : index
    %c0_0 = arith.constant 0 : index
    %0 = vector.load %arg0[%c0, %c0_0] : memref<16x32xf32, #tpu.memory_space<vmem>>, vector<16x32xf32>
    %c0_1 = arith.constant 0 : index
    %c0_2 = arith.constant 0 : index
    %1 = vector.load %arg1[%c0_1, %c0_2] : memref<16x1xf32, #tpu.memory_space<vmem>>, vector<16x1xf32>
    %c0_3 = arith.constant 0 : index
    %c0_4 = arith.constant 0 : index
    %2 = vector.load %arg2[%c0_3, %c0_4] : memref<8x32xf32, #tpu.memory_space<vmem>>, vector<8x32xf32>
    %3 = vector.extract_strided_slice %2 {offsets = [0, 0], sizes = [1, 32], strides = [1, 1]} : vector<8x32xf32> to vector<1x32xf32>
    %4 = vector.extract_strided_slice %2 {offsets = [1, 0], sizes = [1, 32], strides = [1, 1]} : vector<8x32xf32> to vector<1x32xf32>
    %5 = vector.extract_strided_slice %2 {offsets = [2, 0], sizes = [1, 32], strides = [1, 1]} : vector<8x32xf32> to vector<1x32xf32>
    %6 = vector.extract_strided_slice %2 {offsets = [3, 0], sizes = [1, 1], strides = [1, 1]} : vector<8x32xf32> to vector<1x1xf32>
    %7 = vector.extract_strided_slice %2 {offsets = [4, 0], sizes = [1, 1], strides = [1, 1]} : vector<8x32xf32> to vector<1x1xf32>
    %8 = vector.extract_strided_slice %2 {offsets = [5, 0], sizes = [1, 1], strides = [1, 1]} : vector<8x32xf32> to vector<1x1xf32>
    %9 = vector.broadcast %6 : vector<1x1xf32> to vector<16x1xf32>
    %10 = arith.mulf %1, %9 : vector<16x1xf32>
    %11 = vector.broadcast %7 : vector<1x1xf32> to vector<16x1xf32>
    %12 = arith.addf %10, %11 : vector<16x1xf32>
    %c0_5 = arith.constant 0 : index
    %c0_6 = arith.constant 0 : index
    %13 = vector.load %arg3[%c0_5, %c0_6] : memref<32x32xf32, #tpu.memory_space<vmem>>, vector<32x32xf32>
    %cst = arith.constant dense<0.000000e+00> : vector<16x32xf32>
    %14 = tpu.matmul %0, %13, %cst {dimension_numbers = #tpu.dot_dimension_numbers<[1], [0], [0], [1], [0, 0, 1, 1], [], []>} : vector<16x32xf32>, vector<32x32xf32>, vector<16x32xf32> -> vector<16x32xf32>
    %15 = vector.broadcast %12 : vector<16x1xf32> to vector<16x32xf32>
    %16 = vector.broadcast %3 : vector<1x32xf32> to vector<16x32xf32>
    %17 = arith.mulf %15, %16 : vector<16x32xf32>
    %18 = arith.addf %14, %17 : vector<16x32xf32>
    %19 = vector.broadcast %4 : vector<1x32xf32> to vector<16x32xf32>
    %20 = arith.addf %18, %19 : vector<16x32xf32>
    %21 = math.tanh %20 : vector<16x32xf32>
    %22 = arith.mulf %21, %21 : vector<16x32xf32>
    %cst_7 = arith.constant 1.000000e+00 : f32
    %23 = vector.broadcast %cst_7 : f32 to vector<16x32xf32>
    %24 = arith.subf %23, %22 : vector<16x32xf32>
    %25 = vector.broadcast %6 : vector<1x1xf32> to vector<1x32xf32>
    %26 = arith.mulf %25, %3 : vector<1x32xf32>
    %27 = vector.broadcast %26 : vector<1x32xf32> to vector<16x32xf32>
    %28 = arith.mulf %24, %27 : vector<16x32xf32>
    %c0_8 = arith.constant 0 : index
    %c0_9 = arith.constant 0 : index
    %c0_10 = arith.constant 0 : index
    %29 = vector.load %arg4[%c0_8, %c0_9, %c0_10] : memref<2x32x32xf32, #tpu.memory_space<vmem>>, vector<1x32x32xf32>
    %30 = vector.shape_cast %29 : vector<1x32x32xf32> to vector<32x32xf32>
    %31 = vector.extract_strided_slice %2 {offsets = [6, 0], sizes = [1, 32], strides = [1, 1]} : vector<8x32xf32> to vector<1x32xf32>
    %32 = tpu.concatenate %21, %28 in 0 : vector<16x32xf32>, vector<16x32xf32> -> vector<32x32xf32>
    %cst_11 = arith.constant dense<0.000000e+00> : vector<32x32xf32>
    %33 = tpu.matmul %32, %30, %cst_11 {dimension_numbers = #tpu.dot_dimension_numbers<[1], [0], [0], [1], [0, 0, 1, 1], [], []>} : vector<32x32xf32>, vector<32x32xf32>, vector<32x32xf32> -> vector<32x32xf32>
    %34 = vector.extract_strided_slice %33 {offsets = [0, 0], sizes = [16, 32], strides = [1, 1]} : vector<32x32xf32> to vector<16x32xf32>
    %35 = vector.broadcast %31 : vector<1x32xf32> to vector<16x32xf32>
    %36 = arith.addf %34, %35 : vector<16x32xf32>
    %37 = math.tanh %36 : vector<16x32xf32>
    %38 = arith.mulf %37, %37 : vector<16x32xf32>
    %cst_12 = arith.constant 1.000000e+00 : f32
    %39 = vector.broadcast %cst_12 : f32 to vector<16x32xf32>
    %40 = arith.subf %39, %38 : vector<16x32xf32>
    %41 = vector.extract_strided_slice %33 {offsets = [16, 0], sizes = [16, 32], strides = [1, 1]} : vector<32x32xf32> to vector<16x32xf32>
    %42 = arith.mulf %40, %41 : vector<16x32xf32>
    %c1 = arith.constant 1 : index
    %c0_13 = arith.constant 0 : index
    %c0_14 = arith.constant 0 : index
    %43 = vector.load %arg4[%c1, %c0_13, %c0_14] : memref<2x32x32xf32, #tpu.memory_space<vmem>>, vector<1x32x32xf32>
    %44 = vector.shape_cast %43 : vector<1x32x32xf32> to vector<32x32xf32>
    %45 = vector.extract_strided_slice %2 {offsets = [7, 0], sizes = [1, 32], strides = [1, 1]} : vector<8x32xf32> to vector<1x32xf32>
    %46 = tpu.concatenate %37, %42 in 0 : vector<16x32xf32>, vector<16x32xf32> -> vector<32x32xf32>
    %cst_15 = arith.constant dense<0.000000e+00> : vector<32x32xf32>
    %47 = tpu.matmul %46, %44, %cst_15 {dimension_numbers = #tpu.dot_dimension_numbers<[1], [0], [0], [1], [0, 0, 1, 1], [], []>} : vector<32x32xf32>, vector<32x32xf32>, vector<32x32xf32> -> vector<32x32xf32>
    %48 = vector.extract_strided_slice %47 {offsets = [0, 0], sizes = [16, 32], strides = [1, 1]} : vector<32x32xf32> to vector<16x32xf32>
    %49 = vector.broadcast %45 : vector<1x32xf32> to vector<16x32xf32>
    %50 = arith.addf %48, %49 : vector<16x32xf32>
    %51 = math.tanh %50 : vector<16x32xf32>
    %52 = arith.mulf %51, %51 : vector<16x32xf32>
    %cst_16 = arith.constant 1.000000e+00 : f32
    %53 = vector.broadcast %cst_16 : f32 to vector<16x32xf32>
    %54 = arith.subf %53, %52 : vector<16x32xf32>
    %55 = vector.extract_strided_slice %47 {offsets = [16, 0], sizes = [16, 32], strides = [1, 1]} : vector<32x32xf32> to vector<16x32xf32>
    %56 = arith.mulf %54, %55 : vector<16x32xf32>
    %57 = vector.broadcast %5 : vector<1x32xf32> to vector<16x32xf32>
    %58 = arith.mulf %51, %57 : vector<16x32xf32>
    %cst_17 = arith.constant dense<0.000000e+00> : vector<16xf32>
    %59 = vector.multi_reduction <add>, %58, %cst_17 [1] : vector<16x32xf32> to vector<16xf32>
    %60 = vector.shape_cast %59 : vector<16xf32> to vector<16x1xf32>
    %61 = vector.broadcast %8 : vector<1x1xf32> to vector<16x1xf32>
    %62 = arith.addf %60, %61 : vector<16x1xf32>
    %63 = vector.broadcast %5 : vector<1x32xf32> to vector<16x32xf32>
    %64 = arith.mulf %56, %63 : vector<16x32xf32>
    %cst_18 = arith.constant dense<0.000000e+00> : vector<16xf32>
    %65 = vector.multi_reduction <add>, %64, %cst_18 [1] : vector<16x32xf32> to vector<16xf32>
    %66 = vector.shape_cast %65 : vector<16xf32> to vector<16x1xf32>
    %cst_19 = arith.constant 0.000000e+00 : f32
    %67 = vector.broadcast %cst_19 : f32 to vector<16x1xf32>
    %68 = arith.maximumf %62, %67 : vector<16x1xf32>
    %69 = vector.broadcast %cst_19 : f32 to vector<16x1xf32>
    %70 = arith.subf %62, %69 : vector<16x1xf32>
    %71 = arith.cmpf one, %70, %70 : vector<16x1xf32>
    %72 = vector.broadcast %cst_19 : f32 to vector<16x1xf32>
    %73 = arith.addf %62, %72 : vector<16x1xf32>
    %74 = math.absf %70 : vector<16x1xf32>
    %cst_20 = arith.constant 0.000000e+00 : f32
    %75 = vector.broadcast %cst_20 : f32 to vector<16x1xf32>
    %76 = arith.subf %75, %74 : vector<16x1xf32>
    %77 = math.exp %76 : vector<16x1xf32>
    %78 = math.log1p %77 : vector<16x1xf32>
    %79 = arith.addf %68, %78 : vector<16x1xf32>
    %80 = arith.select %71, %73, %79 : vector<16x1xi1>, vector<16x1xf32>
    %cst_21 = arith.constant 0.000000e+00 : f32
    %81 = vector.broadcast %cst_21 : f32 to vector<16x1xf32>
    %82 = arith.subf %81, %62 : vector<16x1xf32>
    %83 = math.exp %82 : vector<16x1xf32>
    %cst_22 = arith.constant 1.000000e+00 : f32
    %84 = vector.broadcast %cst_22 : f32 to vector<16x1xf32>
    %85 = arith.addf %84, %83 : vector<16x1xf32>
    %cst_23 = arith.constant 1.000000e+00 : f32
    %86 = vector.broadcast %cst_23 : f32 to vector<16x1xf32>
    %87 = arith.divf %86, %85 : vector<16x1xf32>
    %88 = arith.mulf %66, %87 : vector<16x1xf32>
    %cst_24 = arith.constant 1.000000e-10 : f32
    %89 = vector.broadcast %cst_24 : f32 to vector<16x1xf32>
    %90 = arith.addf %88, %89 : vector<16x1xf32>
    %91 = math.log %90 : vector<16x1xf32>
    %92 = arith.subf %80, %91 : vector<16x1xf32>
    %93 = tpu.concatenate %92, %91, %80, %88 in 1 : vector<16x1xf32>, vector<16x1xf32>, vector<16x1xf32>, vector<16x1xf32> -> vector<16x4xf32>
    %c0_25 = arith.constant 0 : index
    %c0_26 = arith.constant 0 : index
    %94 = vector.load %arg5[%c0_25, %c0_26] : memref<16x4xf32, #tpu.memory_space<vmem>>, vector<16x4xf32>
    tpu.vector_store %arg5[%c0_25, %c0_26], %93 {strides = array<i32>} : memref<16x4xf32, #tpu.memory_space<vmem>>, vector<16x4xf32>,
    return
  }
}

</mosaic_0001>

<llo_original>
// kernel: tpu_custom_call.1
$region0: #{tpu_custom_call.1}
  #allocation0 [shape = 'u32[]', space=smem, size = 0x4, offset = 0x4, fixed_abs, tag = 'smem constant byte address 0x4 - core index']
  #allocation1 [shape = 'u32[72,128]{1,0:T(1,128)}', space=vmem, size = 0x9000, scoped, tag = 'internal scratch']
  %s0 = inlined_call_operand.vmem [shape: f32[16,32], index: 0, kind: input, shape index: {}]
  %s1 = inlined_call_operand.vmem [shape: f32[16,1], index: 1, kind: input, shape index: {}]
  %s2 = inlined_call_operand.hbm [shape: f32[8,32], index: 2, kind: input, shape index: {}]
  %s3 = inlined_call_operand.hbm [shape: f32[32,32], index: 3, kind: input, shape index: {}]
  %s4 = inlined_call_operand.hbm [shape: f32[2,32,32], index: 4, kind: input, shape index: {}]
  %s5 = inlined_call_operand.vmem [shape: f32[16,4], index: 5, kind: output, shape index: {}]
  %s6 = sld [smem:[#allocation0]]
  $region42: #{tpu_custom_call.1} parent=0
    _
  %s8 = ssub.s32 1, %s6
  %s9 = scalar_select 0, %s8, %s6
  $region1: #{tpu_custom_call.1} parent=0
    #allocation2 [shape = 'u8[4096]{0}', space=vmem, size = 0x1000, scoped, tag = 'input window, operand 2, single buffered']
    #allocation3 [shape = 's32[1]{0}', space=sflag, size = 0x4, scoped, tag = 'scoped memory for tpu_custom_call.1']
    #allocation4 [shape = 'u8[16384]{0}', space=vmem, size = 0x4000, scoped, tag = 'input window, operand 3, single buffered']
    #allocation5 [shape = 's32[1]{0}', space=sflag, size = 0x4, scoped, tag = 'scoped memory for tpu_custom_call.1']
    #allocation6 [shape = 'u8[32768]{0}', space=vmem, size = 0x8000, scoped, tag = 'input window, operand 4, single buffered']
    %10 = vsyncpa [#allocation3], 0
    %11 = vsyncpa [#allocation5], 0
    // Predicated region
    $region2: #{tpu_custom_call.1} parent=1 // pred_check
      _
    $region3: #{tpu_custom_call.1} parent=1 // pred_check_branch
      %13 = sbr.rel (0) target = $region5
    $region4: #{tpu_custom_call.1} parent=1 // pred_region
      _
    $region5: #{tpu_custom_call.1} parent=1 // pred_fallthru
      _
    // Predicated region
    $region6: #{tpu_custom_call.1} parent=1 // pred_check
      _
    $region7: #{tpu_custom_call.1} parent=1 // pred_check_branch
      %15 = sbr.rel (0) target = $region9
    $region8: #{tpu_custom_call.1} parent=1 // pred_region
      _
    $region9: #{tpu_custom_call.1} parent=1 // pred_fallthru
      _
    // Predicated region
    $region10: #{tpu_custom_call.1} parent=1 // pred_check
      _
    $region11: #{tpu_custom_call.1} parent=1 // pred_check_branch
      %17 = sbr.rel (0) target = $region13
    $region12: #{tpu_custom_call.1} parent=1 // pred_region
      %19 = vsyncadd [#allocation3], 0
      %s21 = sshll.u32 %s2, 4
      %s22 = int_to_ptr.hbm [resolvable:$true] %s21
      %s23 = sshll.u32 [#allocation2], 4
      %s24 = int_to_ptr.vmem [resolvable:$true] %s23
      %26 = dma.hbm_to_vmem [thread:$0]  %s22, 128, %s24, [#allocation3]
    $region13: #{tpu_custom_call.1} parent=1 // pred_fallthru
      _
    // Predicated region
    $region14: #{tpu_custom_call.1} parent=1 // pred_check
      _
    $region15: #{tpu_custom_call.1} parent=1 // pred_check_branch
      %28 = sbr.rel (0) target = $region17
    $region16: #{tpu_custom_call.1} parent=1 // pred_region
      %30 = vsyncadd [#allocation5], 0
      %s31 = sshll.u32 %s3, 4
      %s32 = int_to_ptr.hbm [resolvable:$true] %s31
      %s33 = sshll.u32 [#allocation4], 4
      %s34 = int_to_ptr.vmem [resolvable:$true] %s33
      %39 = dma.hbm_to_vmem [thread:$0]  %s32, 512, %s34, [#allocation5], 128, 128, 8
    $region17: #{tpu_custom_call.1} parent=1 // pred_fallthru
      _
    // Predicated region
    $region18: #{tpu_custom_call.1} parent=1 // pred_check
      _
    $region19: #{tpu_custom_call.1} parent=1 // pred_check_branch
      %41 = sbr.rel (0) target = $region21
    $region20: #{tpu_custom_call.1} parent=1 // pred_region
      %43 = vsyncadd [#allocation5], 0
      %s44 = sshll.u32 %s4, 4
      %s45 = int_to_ptr.hbm [resolvable:$true] %s44
      %s46 = sshll.u32 [#allocation6], 4
      %s47 = int_to_ptr.vmem [resolvable:$true] %s46
      %52 = dma.hbm_to_vmem [thread:$0]  %s45, 1024, %s47, [#allocation5], 128, 128, 8
    $region21: #{tpu_custom_call.1} parent=1 // pred_fallthru
      _
    // Predicated region
    $region22: #{tpu_custom_call.1} parent=1 // pred_check
      _
    $region23: #{tpu_custom_call.1} parent=1 // pred_check_branch
      %54 = sbr.rel (0) target = $region25
    $region24: #{tpu_custom_call.1} parent=1 // pred_region
      %56 = dma.done [#allocation3], 128
    $region25: #{tpu_custom_call.1} parent=1 // pred_fallthru
      _
    // Predicated region
    $region26: #{tpu_custom_call.1} parent=1 // pred_check
      _
    $region27: #{tpu_custom_call.1} parent=1 // pred_check_branch
      %58 = sbr.rel (0) target = $region29
    $region28: #{tpu_custom_call.1} parent=1 // pred_region
      %60 = dma.done [#allocation5], 512
    $region29: #{tpu_custom_call.1} parent=1 // pred_fallthru
      _
    // Predicated region
    $region30: #{tpu_custom_call.1} parent=1 // pred_check
      _
    $region31: #{tpu_custom_call.1} parent=1 // pred_check_branch
      %62 = sbr.rel (0) target = $region33
    $region32: #{tpu_custom_call.1} parent=1 // pred_region
      %64 = dma.done [#allocation5], 1024
    $region33: #{tpu_custom_call.1} parent=1 // pred_fallthru
      _
    %v65 = vld [vmem:[%s0] sm:$0xff]
    %v66 = vld [vmem:[%s0 + $0x8] sm:$0xff]
    %v67 = vld [vmem:[%s1] sm:$0xff]
    %v68 = vld [vmem:[%s1 + $0x8] sm:$0xff]
    %v69 = vld [vmem:[#allocation2] sm:$0xff]
    %v70 = vperm.slane %v69, 3
    %v71 = vmul.f32 %v67, %v70
    %v72 = vmul.f32 %v68, %v70
    %v73 = vperm.slane %v69, 4
    %v74 = vadd.f32 %v71, %v73
    %v75 = vadd.f32 %v72, %v73
    %v76 = vld [vmem:[#allocation4] sm:$0xff]
    %v77 = vld [vmem:[#allocation4 + $0x8] sm:$0xff]
    %v78 = vld [vmem:[#allocation4 + $0x10] sm:$0xff]
    %v79 = vld [vmem:[#allocation4 + $0x18] sm:$0xff]
    %81 = vset.pattern.permute.xlu0 0
    %82 = vperm.xlu0 %81, %v74
    %v83 = vpop.permute.xlu0 %82
    %86 = vset.pattern.permute.xlu0 0
    %87 = vperm.xlu0 %86, %v75
    %v88 = vpop.permute.xlu0 %87
    %v90 = vperm.slane %v69, 0
    %v91 = vmul.f32 %v83, %v90
    %v92 = vmul.f32 %v88, %v90
    %vm93 = vcmask 261120
    %v95 = vsel %vm93, %v65, 0
    %v98 = vsel %vm93, %v66, 0
    %100 = vmatpush.msra.mxu0 0.0
    %101 = vmatpush.msra.mxu0 0.0
    %102 = vmatpush.msra.mxu0 0.0
    %103 = vmatpush.msra.mxu0 0.0
    %104 = vmatpush.msra.mxu0 0.0
    %105 = vmatpush.msra.mxu0 0.0
    %106 = vmatpush.msra.mxu0 0.0
    %107 = vmatpush.msra.mxu0 0.0
    %108 = vmatpush.msra.mxu0 0.0
    %109 = vmatpush.msra.mxu0 0.0
    %110 = vmatpush.msra.mxu0 0.0
    %111 = vmatpush.msra.mxu0 0.0
    %112 = vmatpush.msra.mxu0 %v79
    %113 = vmatpush.msra.mxu0 %v78
    %114 = vmatpush.msra.mxu0 %v77
    %115 = vmatpush.msra.mxu0 %v76
    %116 = vmatmul.f32.gmra.mxu0 %v95
    %v117 = vpop.f32.mrf.mxu0
    %v118 = vadd.f32 %v91, %v117
    %119 = vmatmul.f32.gmra.mxu0 %v98
    %v120 = vpop.f32.mrf.mxu0
    %v121 = vadd.f32 %v92, %v120
    %122 = vdwg.mxu0
    %v123 = vperm.slane %v69, 1
    %v124 = vadd.f32 %v118, %v123
    %v125 = vadd.f32 %v121, %v123
    %v126 = vtanh.pop %v124
    %v127 = vtanh.pop %v125
    %v128 = vmul.f32 %v126, %v126
    %v129 = vmul.f32 %v127, %v127
    %v130 = vsub.f32 1.0, %v128
    %v131 = vsub.f32 1.0, %v129
    %133 = vset.pattern.permute.xlu0 0
    %134 = vperm.xlu0 %133, %v69
    %v135 = vpop.permute.xlu0 %134
    %v137 = vrot.slane %v69, 5
    %v139 = vmul.f32 %v135, %v137
    %v140 = vperm.slane %v139, 3
    %v141 = vmul.f32 %v130, %v140
    %v142 = vmul.f32 %v131, %v140
    %v143 = vld [vmem:[#allocation6] sm:$0xff]
    %v144 = vld [vmem:[#allocation6 + $0x8] sm:$0xff]
    %v145 = vld [vmem:[#allocation6 + $0x10] sm:$0xff]
    %v146 = vld [vmem:[#allocation6 + $0x18] sm:$0xff]
    %v148 = vsel %vm93, %v126, 0
    %v151 = vsel %vm93, %v127, 0
    %v154 = vsel %vm93, %v141, 0
    %v157 = vsel %vm93, %v142, 0
    %159 = vmatpush.msra.mxu0 0.0
    %160 = vmatpush.msra.mxu0 0.0
    %161 = vmatpush.msra.mxu0 0.0
    %162 = vmatpush.msra.mxu0 0.0
    %163 = vmatpush.msra.mxu0 0.0
    %164 = vmatpush.msra.mxu0 0.0
    %165 = vmatpush.msra.mxu0 0.0
    %166 = vmatpush.msra.mxu0 0.0
    %167 = vmatpush.msra.mxu0 0.0
    %168 = vmatpush.msra.mxu0 0.0
    %169 = vmatpush.msra.mxu0 0.0
    %170 = vmatpush.msra.mxu0 0.0
    %171 = vmatpush.msra.mxu0 %v146
    %172 = vmatpush.msra.mxu0 %v145
    %173 = vmatpush.msra.mxu0 %v144
    %174 = vmatpush.msra.mxu0 %v143
    %175 = vmatmul.f32.gmra.mxu0 %v148
    %v176 = vpop.f32.mrf.mxu0
    %v177 = vadd.f32 0.0, %v176
    %178 = vmatmul.f32.gmra.mxu0 %v151
    %v179 = vpop.f32.mrf.mxu0
    %v180 = vadd.f32 0.0, %v179
    %181 = vmatmul.f32.gmra.mxu0 %v154
    %v182 = vpop.f32.mrf.mxu0
    %v183 = vadd.f32 0.0, %v182
    %184 = vmatmul.f32.gmra.mxu0 %v157
    %v185 = vpop.f32.mrf.mxu0
    %v186 = vadd.f32 0.0, %v185
    %187 = vdwg.mxu0
    %v188 = vperm.slane %v69, 6
    %v189 = vadd.f32 %v177, %v188
    %v190 = vadd.f32 %v180, %v188
    %v191 = vtanh.pop %v189
    %v192 = vtanh.pop %v190
    %v193 = vmul.f32 %v191, %v191
    %v194 = vmul.f32 %v192, %v192
    %v195 = vsub.f32 1.0, %v193
    %v196 = vsub.f32 1.0, %v194
    %v197 = vmul.f32 %v195, %v183
    %v198 = vmul.f32 %v196, %v186
    %s199 = scalar_lea.vmem [#allocation6], 32
    %v200 = vld [vmem:[%s199] sm:$0xff]
    %v201 = vld [vmem:[%s199 + $0x8] sm:$0xff]
    %v202 = vld [vmem:[%s199 + $0x10] sm:$0xff]
    %v203 = vld [vmem:[%s199 + $0x18] sm:$0xff]
    %v205 = vsel %vm93, %v191, 0
    %v208 = vsel %vm93, %v192, 0
    %v211 = vsel %vm93, %v197, 0
    %v214 = vsel %vm93, %v198, 0
    %216 = vmatpush.msra.mxu0 0.0
    %217 = vmatpush.msra.mxu0 0.0
    %218 = vmatpush.msra.mxu0 0.0
    %219 = vmatpush.msra.mxu0 0.0
    %220 = vmatpush.msra.mxu0 0.0
    %221 = vmatpush.msra.mxu0 0.0
    %222 = vmatpush.msra.mxu0 0.0
    %223 = vmatpush.msra.mxu0 0.0
    %224 = vmatpush.msra.mxu0 0.0
    %225 = vmatpush.msra.mxu0 0.0
    %226 = vmatpush.msra.mxu0 0.0
    %227 = vmatpush.msra.mxu0 0.0
    %228 = vmatpush.msra.mxu0 %v203
    %229 = vmatpush.msra.mxu0 %v202
    %230 = vmatpush.msra.mxu0 %v201
    %231 = vmatpush.msra.mxu0 %v200
    %232 = vmatmul.f32.gmra.mxu0 %v205
    %v233 = vpop.f32.mrf.mxu0
    %v234 = vadd.f32 0.0, %v233
    %235 = vmatmul.f32.gmra.mxu0 %v208
    %v236 = vpop.f32.mrf.mxu0
    %v237 = vadd.f32 0.0, %v236
    %238 = vmatmul.f32.gmra.mxu0 %v211
    %v239 = vpop.f32.mrf.mxu0
    %v240 = vadd.f32 0.0, %v239
    %241 = vmatmul.f32.gmra.mxu0 %v214
    %v242 = vpop.f32.mrf.mxu0
    %v243 = vadd.f32 0.0, %v242
    %244 = vdwg.mxu0
    %v245 = vperm.slane %v69, 7
    %v246 = vadd.f32 %v234, %v245
    %v247 = vadd.f32 %v237, %v245
    %v248 = vtanh.pop %v246
    %v249 = vtanh.pop %v247
    %v250 = vmul.f32 %v248, %v248
    %v251 = vmul.f32 %v249, %v249
    %v252 = vsub.f32 1.0, %v250
    %v253 = vsub.f32 1.0, %v251
    %v254 = vmul.f32 %v252, %v240
    %v255 = vmul.f32 %v253, %v243
    %v256 = vperm.slane %v69, 2
    %v257 = vmul.f32 %v248, %v256
    %v258 = vmul.f32 %v249, %v256
    %v259 = vsel %vm93, %v257, 0.0
    %260 = vadd.xlane.f32.xlu0 %v259
    %v261 = vpop.xlane.xlu0 %260
    %v262 = vsel %vm93, %v258, 0.0
    %263 = vadd.xlane.f32.xlu0 %v262
    %v264 = vpop.xlane.xlu0 %263
    %v265 = vperm.slane %v69, 5
    %v266 = vadd.f32 %v261, %v265
    %v267 = vadd.f32 %v264, %v265
    %v268 = vmul.f32 %v254, %v256
    %v269 = vmul.f32 %v255, %v256
    %v270 = vsel %vm93, %v268, 0.0
    %271 = vadd.xlane.f32.xlu0 %v270
    %v272 = vpop.xlane.xlu0 %271
    %v273 = vsel %vm93, %v269, 0.0
    %274 = vadd.xlane.f32.xlu0 %v273
    %v275 = vpop.xlane.xlu0 %274
    %v276 = vmax.f32 %v266, 0.0
    %v277 = vmax.f32 %v267, 0.0
    %vm278 = vcmp.ne.f32.partialorder %v266, %v266
    %vm279 = vcmp.ne.f32.partialorder %v267, %v267
    %v280 = vadd.f32 %v266, 0.0
    %v281 = vadd.f32 %v267, 0.0
    %v282 = vand.u32 2147483647, %v266
    %v283 = vand.u32 2147483647, %v267
    %v284 = vsub.f32 0.0, %v282
    %v285 = vsub.f32 0.0, %v283
    %v286 = vmul.f32 %v284, 1.442695
    %v287 = vpow.pop %v286
    %v288 = vmul.f32 %v285, 1.442695
    %v289 = vpow.pop %v288
    %v290 = vadd.f32 %v287, 1.0
    %v291 = vlog2.pop %v290
    %v292 = vmul.f32 %v291, 0.6931472
    %v293 = vmul.f32 -0.5, %v287
    %v294 = vadd.f32 %v293, 1.0
    %v295 = vmul.f32 %v294, %v287
    %v296 = vand.u32 2147483647, %v287
    %vm297 = vcmp.lt.f32.partialorder %v296, 0.0004427343
    %v298 = vsel %vm297, %v295, %v292
    %v299 = vadd.f32 %v289, 1.0
    %v300 = vlog2.pop %v299
    %v301 = vmul.f32 %v300, 0.6931472
    %v302 = vmul.f32 -0.5, %v289
    %v303 = vadd.f32 %v302, 1.0
    %v304 = vmul.f32 %v303, %v289
    %v305 = vand.u32 2147483647, %v289
    %vm306 = vcmp.lt.f32.partialorder %v305, 0.0004427343
    %v307 = vsel %vm306, %v304, %v301
    %v308 = vadd.f32 %v276, %v298
    %v309 = vadd.f32 %v277, %v307
    %v310 = vsel %vm278, %v280, %v308
    %v311 = vsel %vm279, %v281, %v309
    %v312 = vsub.f32 0.0, %v266
    %v313 = vsub.f32 0.0, %v267
    %v314 = vmul.f32 %v312, 1.442695
    %v315 = vpow.pop %v314
    %v316 = vmul.f32 %v313, 1.442695
    %v317 = vpow.pop %v316
    %v318 = vadd.f32 %v315, 1.0
    %v319 = vadd.f32 %v317, 1.0
    %v320 = vrcp.pop %v318
    %v321 = vmul.f32 %v318, %v320
    %v322 = vsub.f32 1.0, %v321
    %v323 = vmul.f32 %v320, %v322
    %v324 = vadd.f32 %v320, %v323
    %vm325 = vweird.f32 %v318
    %vm326 = vweird.f32 %v320
    %vm327 = vmor %vm325, %vm326
    %v328 = vsel %vm327, %v320, %v324
    %v329 = vand.u32 2147483647, %v318
    %vm330 = vcmp.eq.f32.partialorder %v329, 8.507059e+37
    %v331 = vand.u32 %v318, 2147483648
    %v332 = vor.u32 1.1754944e-38, %v331
    %v333 = vsel %vm330, %v332, %v328
    %v334 = vmul.f32 1.0, %v333
    %v335 = vrcp.pop %v319
    %v336 = vmul.f32 %v319, %v335
    %v337 = vsub.f32 1.0, %v336
    %v338 = vmul.f32 %v335, %v337
    %v339 = vadd.f32 %v335, %v338
    %vm340 = vweird.f32 %v319
    %vm341 = vweird.f32 %v335
    %vm342 = vmor %vm340, %vm341
    %v343 = vsel %vm342, %v335, %v339
    %v344 = vand.u32 2147483647, %v319
    %vm345 = vcmp.eq.f32.partialorder %v344, 8.507059e+37
    %v346 = vand.u32 %v319, 2147483648
    %v347 = vor.u32 1.1754944e-38, %v346
    %v348 = vsel %vm345, %v347, %v343
    %v349 = vmul.f32 1.0, %v348
    %v350 = vmul.f32 %v272, %v334
    %v351 = vmul.f32 %v275, %v349
    %v352 = vadd.f32 %v350, 1e-10
    %v353 = vadd.f32 %v351, 1e-10
    %v354 = vlog2.pop %v352
    %v355 = vmul.f32 %v354, 0.6931472
    %v356 = vlog2.pop %v353
    %v357 = vmul.f32 %v356, 0.6931472
    %v358 = vsub.f32 %v310, %v355
    %v359 = vsub.f32 %v311, %v357
    %362 = vrot.lane.b32.xlu0 %v355, 1
    %v363 = vpop.permute.xlu0 %362
    %364 = vrot.lane.b32.xlu0 %v357, 1
    %v365 = vpop.permute.xlu0 %364
    %370 = vrot.lane.b32.xlu0 %v310, 2
    %v371 = vpop.permute.xlu0 %370
    %372 = vrot.lane.b32.xlu0 %v311, 2
    %v373 = vpop.permute.xlu0 %372
    %378 = vrot.lane.b32.xlu0 %v350, 3
    %v379 = vpop.permute.xlu0 %378
    %380 = vrot.lane.b32.xlu0 %v351, 3
    %v381 = vpop.permute.xlu0 %380
    %vm384 = vcmask 7168
    %v385 = vsel %vm384, %v358, %v363
    %v386 = vsel %vm384, %v359, %v365
    %vm387 = vcmask 15360
    %v388 = vsel %vm387, %v385, %v371
    %v389 = vsel %vm387, %v386, %v373
    %vm390 = vcmask 23552
    %v391 = vsel %vm390, %v388, %v379
    %v392 = vsel %vm390, %v389, %v381
    %vm393 = vcmask 31744
    %394 = vst.msk [vmem:[%s5] sm:$0xff] %vm393, %v391
    %395 = vst.msk [vmem:[%s5 + $0x8] sm:$0xff] %vm393, %v392
    // Predicated region
    $region34: #{tpu_custom_call.1} parent=1 // pred_check
      _
    $region35: #{tpu_custom_call.1} parent=1 // pred_check_branch
      %397 = sbr.rel (0) target = $region37
    $region36: #{tpu_custom_call.1} parent=1 // pred_region
      _
    $region37: #{tpu_custom_call.1} parent=1 // pred_fallthru
      _
    // Predicated region
    $region38: #{tpu_custom_call.1} parent=1 // pred_check
      _
    $region39: #{tpu_custom_call.1} parent=1 // pred_check_branch
      %399 = sbr.rel (0) target = $region41
    $region40: #{tpu_custom_call.1} parent=1 // pred_region
      _
    $region41: #{tpu_custom_call.1} parent=1 // pred_fallthru
      _
    %400 = vsyncpa [#allocation3], 1
    %401 = vsyncpa [#allocation5], 1

</llo_original>
